<compile_context>
chip_gen: v7x
topology: tpu7x:2x2x1
jax: 0.10.0
libtpu: 0.0.40
codegen_flags: <defaults>
</compile_context>

<pallas_src>
import jax
import jax.numpy as jnp
from jax.experimental import pallas as pl
from jax.experimental.pallas import tpu as pltpu


def _round_up(x: int, m: int) -> int:
    return ((x + m - 1) // m) * m


def critic_kernel(x_ref, w1_ref, b1_ref, w2_ref, b2_ref, w3_ref, b3_ref, out_ref):
    # obs tile (tb, d_in), already in the bf16 storage dtype (wrapper guarantees it).
    x = x_ref[...]

    # preprocess_net layer 1: Linear + ReLU (bf16 MXU inputs, f32 accumulate / bias / ReLU).
    h1 = jnp.dot(x, w1_ref[...], preferred_element_type=jnp.float32) + b1_ref[...]
    h1 = jnp.maximum(h1, 0.0).astype(w2_ref.dtype)

    # preprocess_net layer 2: Linear + ReLU.
    h2 = jnp.dot(h1, w2_ref[...], preferred_element_type=jnp.float32) + b2_ref[...]
    h2 = jnp.maximum(h2, 0.0)                                   # (tb, Hp) f32

    # Critic.last: H -> 1, computed lane-dense as v_row = w3_row @ h2^T -> (1, tb),
    # so the output store is dense along the 128-lane axis (no masked column stores).
    v_row = jax.lax.dot_general(
        w3_ref[...], h2,                                        # (1, Hp) . (tb, Hp)^T
        dimension_numbers=(((1,), (1,)), ((), ())),
        preferred_element_type=jnp.float32,
    )                                                           # (1, tb)
    out_ref[...] = (v_row + b3_ref[...]).astype(out_ref.dtype)


def _choose_row_tile(batch: int, block_rows: int) -> int:
    """Pick a lane-aligned row tile keeping >=4 grid steps (v7x megacore) when possible."""
    block_rows = max(128, min(block_rows, 8192))       # VMEM guardrail (v7x VMEM is 64 MiB)
    block_rows = (block_rows // 128) * 128             # keep (1, tb) output blocks lane-dense
    target = _round_up(pl.cdiv(batch, 4), 128)
    tb = min(block_rows, target)
    if tb >= batch:
        return batch                                   # single full-extent tile (any B is legal)
    return tb


def critic_forward(obs, packed_params, *, block_rows=2048):
    """obs: [B, obs_dim] (any float dtype) -> V(s): [B, 1] float32."""
    w1, b1, w2, b2, w3_row, b3 = packed_params
    B, d_in = obs.shape
    assert w1.shape[0] == d_in, (w1.shape, d_in)
    hp = w1.shape[1]

    # Stream the dominant input in the bf16 storage dtype; no-op if already bf16.
    if obs.dtype != w1.dtype:
        obs = obs.astype(w1.dtype)

    tb = _choose_row_tile(B, block_rows)
    grid = (pl.cdiv(B, tb),)                           # ragged last block handled by Pallas

    def resident(a):
        # Constant index_map: same block every grid step -> fetched once, stays in VMEM.
        return pl.BlockSpec(a.shape, lambda i: (0, 0))

    flops = 2 * B * (d_in * hp + hp * hp + hp)
    param_bytes = sum(int(p.size) * p.dtype.itemsize for p in packed_params)
    bytes_accessed = B * d_in * obs.dtype.itemsize + B * 4 + param_bytes

    out = pl.pallas_call(
        critic_kernel,
        out_shape=jax.ShapeDtypeStruct((1, B), jnp.float32),    # lane-dense V(s) row
        grid=grid,
        in_specs=[
            pl.BlockSpec((tb, d_in), lambda i: (i, 0)),         # obs: streamed row tiles
            resident(w1), resident(b1),
            resident(w2), resident(b2),
            resident(w3_row), resident(b3),
        ],
        out_specs=pl.BlockSpec((1, tb), lambda i: (0, i)),      # (1, tb) dense lane stores
        compiler_params=pltpu.CompilerParams(
            dimension_semantics=("parallel",),                  # megacore sharding on v7x
            vmem_limit_bytes=32 * 1024 * 1024,
        ),
        cost_estimate=pl.CostEstimate(
            flops=flops, transcendentals=0, bytes_accessed=bytes_accessed),
    )(obs, w1, b1, w2, b2, w3_row, b3)

    return out.reshape(B, 1)


def init_params(key, obs_dim, hidden):
    """Logical (unpadded) f32 params, PyTorch nn.Linear default init, stored [in, out]."""
    def linear(k, fan_in, fan_out):
        kw, kb = jax.random.split(k)
        bound = 1.0 / (fan_in ** 0.5)
        w = jax.random.uniform(kw, (fan_in, fan_out), jnp.float32, -bound, bound)
        b = jax.random.uniform(kb, (fan_out,), jnp.float32, -bound, bound)
        return w, b

    k1, k2, k3 = jax.random.split(key, 3)
    w1, b1 = linear(k1, obs_dim, hidden)   # preprocess layer 1
    w2, b2 = linear(k2, hidden, hidden)    # preprocess layer 2
    w3, b3 = linear(k3, hidden, 1)         # Critic.last (hidden_sizes=(), last_size=1)
    return (w1, b1, w2, b2, w3, b3)


def pack_params(params, dtype=jnp.bfloat16):
    """Pad the hidden width to 128 lanes (exact: padded units stay identically zero through
    Linear+ReLU), cast the big matmul weights to bf16; biases and the final row stay f32."""
    w1, b1, w2, b2, w3, b3 = params
    h = w1.shape[1]
    hp = _round_up(h, 128)
    ph = hp - h
    w1p = jnp.pad(w1, ((0, 0), (0, ph))).astype(dtype)
    b1p = jnp.pad(b1, (0, ph)).reshape(1, hp).astype(jnp.float32)
    w2p = jnp.pad(w2, ((0, ph), (0, ph))).astype(dtype)
    b2p = jnp.pad(b2, (0, ph)).reshape(1, hp).astype(jnp.float32)
    w3r = jnp.pad(w3[:, 0], (0, ph)).reshape(1, hp).astype(jnp.float32)   # f32 row [1, Hp]
    b3p = b3.reshape(1, 1).astype(jnp.float32)
    return (w1p, b1p, w2p, b2p, w3r, b3p)


def critic_ref(obs, packed_params):
    """Pure-JAX reference mirroring the kernel's mixed-precision math."""
    w1, b1, w2, b2, w3_row, b3 = packed_params
    x = obs.astype(w1.dtype)
    h1 = jnp.maximum(jnp.dot(x, w1, preferred_element_type=jnp.float32) + b1, 0.0)
    h1 = h1.astype(w2.dtype)
    h2 = jnp.maximum(jnp.dot(h1, w2, preferred_element_type=jnp.float32) + b2, 0.0)
    return jnp.sum(h2 * w3_row, axis=-1, keepdims=True) + b3


def critic_ref_f32(obs, logical_params):
    """Full-f32 reference of the original PyTorch module semantics."""
    w1, b1, w2, b2, w3, b3 = logical_params
    h1 = jnp.maximum(obs @ w1 + b1, 0.0)
    h2 = jnp.maximum(h1 @ w2 + b2, 0.0)
    return h2 @ w3 + b3


if __name__ == "__main__":
    # Hidden=64 is padded to 128 inside pack_params; B=1000 exercises a 4-step grid
    # (tb=256) with a ragged last block and lane-dense (1, tb) output stores.
    B, OBS_DIM, HIDDEN = 1000, 32, 64

    key = jax.random.PRNGKey(0)
    k_obs, k_par = jax.random.split(key)
    obs_f32 = jax.random.normal(k_obs, (B, OBS_DIM), dtype=jnp.float32)
    logical = init_params(k_par, OBS_DIM, HIDDEN)
    packed = pack_params(logical, dtype=jnp.bfloat16)

    # Main run (wrapper casts obs f32 -> bf16 once before streaming).
    v = jax.block_until_ready(critic_forward(obs_f32, packed))
    assert v.shape == (B, 1), v.shape
    assert bool(jnp.all(jnp.isfinite(v)))

    v_ref = critic_ref(obs_f32, packed)            # same mixed-precision math
    assert jnp.allclose(v, v_ref, atol=2e-3, rtol=2e-3), "mismatch vs mixed-precision reference"

    v_f32 = critic_ref_f32(obs_f32, logical)       # original module semantics (f32)
    assert jnp.allclose(v, v_f32, atol=5e-2, rtol=5e-2), "mismatch vs f32 module reference"

    # Small-batch paths: single full-extent block (B=8) and a non-multiple-of-8 batch (B=5).
    v8 = jax.block_until_ready(critic_forward(obs_f32[:8], packed))
    assert v8.shape == (8, 1) and jnp.allclose(v8, v_ref[:8], atol=2e-3, rtol=2e-3)
    v5 = jax.block_until_ready(critic_forward(obs_f32[:5], packed))
    assert v5.shape == (5, 1) and jnp.allclose(v5, v_ref[:5], atol=2e-3, rtol=2e-3)

    print("KERNEL_OK")
</pallas_src>

<mosaic_0001>
module attributes {stable_mosaic.version = 11 : i64} {
  func.func @critic_kernel(%arg0: i32, %arg1: memref<256x32xbf16, #tpu.memory_space<vmem>>, %arg2: memref<32x128xbf16, #tpu.memory_space<vmem>>, %arg3: memref<1x128xf32, #tpu.memory_space<vmem>>, %arg4: memref<128x128xbf16, #tpu.memory_space<vmem>>, %arg5: memref<1x128xf32, #tpu.memory_space<vmem>>, %arg6: memref<1x128xf32, #tpu.memory_space<vmem>>, %arg7: memref<1x1xf32, #tpu.memory_space<vmem>>, %arg8: memref<1x256xf32, #tpu.memory_space<vmem>>) attributes {dimension_semantics = [#tpu.dimension_semantics<parallel>], iteration_bounds = array<i64: 4>, scalar_prefetch = 0 : i64, scratch_operands = 0 : i64, tpu.core_type = #tpu.core_type<tc>, window_params = [{transform_indices = @transform_0, window_bounds = array<i64: 256, 32>}, {pipeline_mode = #tpu.pipeline_mode<synchronous>, transform_indices = @transform_1, window_bounds = array<i64: 32, 128>}, {pipeline_mode = #tpu.pipeline_mode<synchronous>, transform_indices = @transform_2, window_bounds = array<i64: 1, 128>}, {pipeline_mode = #tpu.pipeline_mode<synchronous>, transform_indices = @transform_3, window_bounds = array<i64: 128, 128>}, {pipeline_mode = #tpu.pipeline_mode<synchronous>, transform_indices = @transform_4, window_bounds = array<i64: 1, 128>}, {pipeline_mode = #tpu.pipeline_mode<synchronous>, transform_indices = @transform_5, window_bounds = array<i64: 1, 128>}, {pipeline_mode = #tpu.pipeline_mode<synchronous>, transform_indices = @transform_6, window_bounds = array<i64: 1, 1>}, {transform_indices = @transform_7, window_bounds = array<i64: 1, 256>}]} {
    %c0 = arith.constant 0 : index
    %c0_0 = arith.constant 0 : index
    %0 = vector.load %arg1[%c0, %c0_0] : memref<256x32xbf16, #tpu.memory_space<vmem>>, vector<256x32xbf16>
    %c0_1 = arith.constant 0 : index
    %c0_2 = arith.constant 0 : index
    %1 = vector.load %arg2[%c0_1, %c0_2] : memref<32x128xbf16, #tpu.memory_space<vmem>>, vector<32x128xbf16>
    %cst = arith.constant dense<0.000000e+00> : vector<256x128xf32>
    %2 = tpu.matmul %0, %1, %cst {dimension_numbers = #tpu.dot_dimension_numbers<[1], [0], [0], [1], [0, 0, 1, 1], [], []>} : vector<256x32xbf16>, vector<32x128xbf16>, vector<256x128xf32> -> vector<256x128xf32>
    %c0_3 = arith.constant 0 : index
    %c0_4 = arith.constant 0 : index
    %3 = vector.load %arg3[%c0_3, %c0_4] : memref<1x128xf32, #tpu.memory_space<vmem>>, vector<1x128xf32>
    %4 = vector.broadcast %3 : vector<1x128xf32> to vector<256x128xf32>
    %5 = arith.addf %2, %4 : vector<256x128xf32>
    %cst_5 = arith.constant 0.000000e+00 : f32
    %6 = vector.broadcast %cst_5 : f32 to vector<256x128xf32>
    %7 = arith.maximumf %5, %6 : vector<256x128xf32>
    %8 = arith.truncf %7 : vector<256x128xf32> to vector<256x128xbf16>
    %c0_6 = arith.constant 0 : index
    %c0_7 = arith.constant 0 : index
    %9 = vector.load %arg4[%c0_6, %c0_7] : memref<128x128xbf16, #tpu.memory_space<vmem>>, vector<128x128xbf16>
    %cst_8 = arith.constant dense<0.000000e+00> : vector<256x128xf32>
    %10 = tpu.matmul %8, %9, %cst_8 {dimension_numbers = #tpu.dot_dimension_numbers<[1], [0], [0], [1], [0, 0, 1, 1], [], []>} : vector<256x128xbf16>, vector<128x128xbf16>, vector<256x128xf32> -> vector<256x128xf32>
    %c0_9 = arith.constant 0 : index
    %c0_10 = arith.constant 0 : index
    %11 = vector.load %arg5[%c0_9, %c0_10] : memref<1x128xf32, #tpu.memory_space<vmem>>, vector<1x128xf32>
    %12 = vector.broadcast %11 : vector<1x128xf32> to vector<256x128xf32>
    %13 = arith.addf %10, %12 : vector<256x128xf32>
    %cst_11 = arith.constant 0.000000e+00 : f32
    %14 = vector.broadcast %cst_11 : f32 to vector<256x128xf32>
    %15 = arith.maximumf %13, %14 : vector<256x128xf32>
    %c0_12 = arith.constant 0 : index
    %c0_13 = arith.constant 0 : index
    %16 = vector.load %arg6[%c0_12, %c0_13] : memref<1x128xf32, #tpu.memory_space<vmem>>, vector<1x128xf32>
    %cst_14 = arith.constant dense<0.000000e+00> : vector<1x256xf32>
    %17 = tpu.matmul %16, %15, %cst_14 {dimension_numbers = #tpu.dot_dimension_numbers<[1], [1], [0], [0], [0, 0, 1, 0], [], []>} : vector<1x128xf32>, vector<256x128xf32>, vector<1x256xf32> -> vector<1x256xf32>
    %c0_15 = arith.constant 0 : index
    %c0_16 = arith.constant 0 : index
    %18 = vector.load %arg7[%c0_15, %c0_16] : memref<1x1xf32, #tpu.memory_space<vmem>>, vector<1x1xf32>
    %19 = vector.broadcast %18 : vector<1x1xf32> to vector<1x256xf32>
    %20 = arith.addf %17, %19 : vector<1x256xf32>
    %c0_17 = arith.constant 0 : index
    %c0_18 = arith.constant 0 : index
    %21 = vector.load %arg8[%c0_17, %c0_18] : memref<1x256xf32, #tpu.memory_space<vmem>>, vector<1x256xf32>
    tpu.vector_store %arg8[%c0_17, %c0_18], %20 {strides = array<i32>} : memref<1x256xf32, #tpu.memory_space<vmem>>, vector<1x256xf32>,
    return
  }
  func.func @transform_0(%arg0: i32) -> (i32, i32) {
    %c0_i32 = arith.constant 0 : i32
    %c0_i32_0 = arith.constant 0 : i32
    return %arg0, %c0_i32 : i32, i32
  }
  func.func @transform_1(%arg0: i32) -> (i32, i32) {
    %c0_i32 = arith.constant 0 : i32
    %c0_i32_0 = arith.constant 0 : i32
    %c0_i32_1 = arith.constant 0 : i32
    return %c0_i32, %c0_i32_0 : i32, i32
  }
  func.func @transform_2(%arg0: i32) -> (i32, i32) {
    %c0_i32 = arith.constant 0 : i32
    %c0_i32_0 = arith.constant 0 : i32
    %c0_i32_1 = arith.constant 0 : i32
    return %c0_i32, %c0_i32_0 : i32, i32
  }
  func.func @transform_3(%arg0: i32) -> (i32, i32) {
    %c0_i32 = arith.constant 0 : i32
    %c0_i32_0 = arith.constant 0 : i32
    %c0_i32_1 = arith.constant 0 : i32
    return %c0_i32, %c0_i32_0 : i32, i32
  }
  func.func @transform_4(%arg0: i32) -> (i32, i32) {
    %c0_i32 = arith.constant 0 : i32
    %c0_i32_0 = arith.constant 0 : i32
    %c0_i32_1 = arith.constant 0 : i32
    return %c0_i32, %c0_i32_0 : i32, i32
  }
  func.func @transform_5(%arg0: i32) -> (i32, i32) {
    %c0_i32 = arith.constant 0 : i32
    %c0_i32_0 = arith.constant 0 : i32
    %c0_i32_1 = arith.constant 0 : i32
    return %c0_i32, %c0_i32_0 : i32, i32
  }
  func.func @transform_6(%arg0: i32) -> (i32, i32) {
    %c0_i32 = arith.constant 0 : i32
    %c0_i32_0 = arith.constant 0 : i32
    %c0_i32_1 = arith.constant 0 : i32
    return %c0_i32, %c0_i32_0 : i32, i32
  }
  func.func @transform_7(%arg0: i32) -> (i32, i32) {
    %c0_i32 = arith.constant 0 : i32
    %c0_i32_0 = arith.constant 0 : i32
    return %c0_i32, %arg0 : i32, i32
  }
}

</mosaic_0001>

<llo_original>
// kernel: tpu_custom_call.1
$region0: #{tpu_custom_call.1}
  #allocation0 [shape = 'u32[]', space=smem, size = 0x4, offset = 0x4, fixed_abs, tag = 'smem constant byte address 0x4 - core index']
  #allocation1 [shape = 'u32[144,128]{1,0:T(1,128)}', space=vmem, size = 0x12000, scoped, tag = 'internal scratch']
  #allocation2 [shape = 'f32[1,1]{1,0:T(1,128)S(1)}', space=vmem, size = 0x200, scoped, tag = 'scoped memory for tpu_custom_call.1']
  %s0 = inlined_call_operand.vmem [shape: bf16[1000,32], index: 0, kind: input, shape index: {}]
  %s1 = inlined_call_operand.vmem [shape: bf16[32,128], index: 1, kind: input, shape index: {}]
  %s2 = inlined_call_operand.vmem [shape: f32[1,128], index: 2, kind: input, shape index: {}]
  %s3 = inlined_call_operand.vmem [shape: bf16[128,128], index: 3, kind: input, shape index: {}]
  %s4 = inlined_call_operand.vmem [shape: f32[1,128], index: 4, kind: input, shape index: {}]
  %s5 = inlined_call_operand.vmem [shape: f32[1,128], index: 5, kind: input, shape index: {}]
  %s6 = inlined_call_operand.<no memory space> [shape: f32[1,1], index: 6, kind: input, shape index: {}]
  %s7 = inlined_call_operand.hbm [shape: f32[1,1000], index: 7, kind: output, shape index: {}]
  %s8 = sld [smem:[#allocation0]]
  $region61: #{tpu_custom_call.1} parent=0
    _
  %s10 = ssub.s32 1, %s8
  %s11 = scalar_select 0, %s10, %s8
  %v12 = vstv %s6
  %13 = vst [vmem:[#allocation2] sm:$0x1] %v12
  $region1: #{tpu_custom_call.1} parent=0
    #allocation3 [shape = 'u8[2048]{0}', space=vmem, size = 0x800, scoped, tag = 'output window, operand 0']
    #allocation4 [shape = 's32[2]{0}', space=sflag, size = 0x8, scoped, tag = 'scoped memory for tpu_custom_call.1']
    %14 = vsyncpa [#allocation4], 0
    %s15 = scalar_lea.sflag [#allocation4], 1
    %16 = vsyncpa %s15, 0
    loop: start=0, step=1, limit=6
    $region2: #{tpu_custom_call.1} parent=1 // loop_pre_header
      _
    $region3: #{tpu_custom_call.1} parent=1 // loop_header
      %s18 = sphi 0, %s22
      %p19 = scmp.ge.s32.totalorder %s18, 6
      %s28 = sphi 0, %s30
      %s31 = sphi 0, %s28
      %s32 = sphi 0, %s31
      %s48 = sphi 0, %s32
      %s52 = sphi 0, %s52
      %s54 = sphi 0, %s52
      %s55 = sphi 0, %s54
      %s69 = sphi 0, %s55
      %s73 = sphi 0, %s73
      %s75 = sphi 0, %s73
      %s76 = sphi 0, %s75
      %s90 = sphi 0, %s76
      %s94 = sphi 0, %s94
      %s96 = sphi 0, %s94
      %s97 = sphi 0, %s96
      %s111 = sphi 0, %s97
      %s115 = sphi 0, %s115
      %s117 = sphi 0, %s115
      %s118 = sphi 0, %s117
      %s132 = sphi 0, %s118
      %s136 = sphi 0, %s136
      %s138 = sphi 0, %s136
      %s139 = sphi 0, %s138
      %s153 = sphi 0, %s139
      %s157 = sphi 0, %s157
      %s159 = sphi 0, %s157
      %s160 = sphi 0, %s159
      %s174 = sphi 0, %s160
      %s180 = sphi 0, %s182
      %s183 = sphi 0, %s180
      %s184 = sphi 0, %s183
      %s200 = sphi 0, %s184
    $region4: #{tpu_custom_call.1} parent=1 // loop_header_branch
      %21 = sbr.rel (%p19) target = $region8
    $region5: #{tpu_custom_call.1} parent=1 // loop_body
      %s23 = ssub.s32 %s18, 1
      %s24 = ssub.s32 %s18, 2
      %s25 = sadd.s32 %s18, 1
      %s26 = ssub.s32 %s18, %s25
      %p27 = scmp.eq.s32.totalorder %s26, 0
      %s29 = sadd.s32 %s28, 1
      %s30 = scalar_select %p27, %s28, %s29
      %p33 = pneg %p27
      %p34 = scmp.eq.s32.totalorder %s18, 3
      %p35 = por %p33, %p34
      %p36 = scmp.ne.s32.totalorder %s28, %s31
      %p37 = scmp.eq.s32.totalorder %s18, 0
      %p38 = por %p36, %p37
      %p39 = scmp.ne.s32.totalorder %s28, %s31
      %p40 = scmp.eq.s32.totalorder %s23, 3
      %p41 = por %p39, %p40
      %p42 = scmp.ne.s32.totalorder %s31, %s32
      %p43 = scmp.eq.s32.totalorder %s23, 0
      %p44 = por %p42, %p43
      %p45 = scmp.ne.s32.totalorder %s31, %s32
      %p46 = scmp.eq.s32.totalorder %s24, 3
      %p47 = por %p45, %p46
      %p49 = scmp.ne.s32.totalorder %s32, %s48
      %p50 = scmp.eq.s32.totalorder %s24, 0
      %p51 = por %p49, %p50
      %s53 = sadd.s32 %s52, 1
      %p56 = scmp.eq.s32.totalorder %s18, 3
      %p57 = scmp.ne.s32.totalorder %s52, %s54
      %p58 = scmp.eq.s32.totalorder %s18, 0
      %p59 = por %p57, %p58
      %p60 = scmp.ne.s32.totalorder %s52, %s54
      %p61 = scmp.eq.s32.totalorder %s23, 3
      %p62 = por %p60, %p61
      %p63 = scmp.ne.s32.totalorder %s54, %s55
      %p64 = scmp.eq.s32.totalorder %s23, 0
      %p65 = por %p63, %p64
      %p66 = scmp.ne.s32.totalorder %s54, %s55
      %p67 = scmp.eq.s32.totalorder %s24, 3
      %p68 = por %p66, %p67
      %p70 = scmp.ne.s32.totalorder %s55, %s69
      %p71 = scmp.eq.s32.totalorder %s24, 0
      %p72 = por %p70, %p71
      %s74 = sadd.s32 %s73, 1
      %p77 = scmp.eq.s32.totalorder %s18, 3
      %p78 = scmp.ne.s32.totalorder %s73, %s75
      %p79 = scmp.eq.s32.totalorder %s18, 0
      %p80 = por %p78, %p79
      %p81 = scmp.ne.s32.totalorder %s73, %s75
      %p82 = scmp.eq.s32.totalorder %s23, 3
      %p83 = por %p81, %p82
      %p84 = scmp.ne.s32.totalorder %s75, %s76
      %p85 = scmp.eq.s32.totalorder %s23, 0
      %p86 = por %p84, %p85
      %p87 = scmp.ne.s32.totalorder %s75, %s76
      %p88 = scmp.eq.s32.totalorder %s24, 3
      %p89 = por %p87, %p88
      %p91 = scmp.ne.s32.totalorder %s76, %s90
      %p92 = scmp.eq.s32.totalorder %s24, 0
      %p93 = por %p91, %p92
      %s95 = sadd.s32 %s94, 1
      %p98 = scmp.eq.s32.totalorder %s18, 3
      %p99 = scmp.ne.s32.totalorder %s94, %s96
      %p100 = scmp.eq.s32.totalorder %s18, 0
      %p101 = por %p99, %p100
      %p102 = scmp.ne.s32.totalorder %s94, %s96
      %p103 = scmp.eq.s32.totalorder %s23, 3
      %p104 = por %p102, %p103
      %p105 = scmp.ne.s32.totalorder %s96, %s97
      %p106 = scmp.eq.s32.totalorder %s23, 0
      %p107 = por %p105, %p106
      %p108 = scmp.ne.s32.totalorder %s96, %s97
      %p109 = scmp.eq.s32.totalorder %s24, 3
      %p110 = por %p108, %p109
      %p112 = scmp.ne.s32.totalorder %s97, %s111
      %p113 = scmp.eq.s32.totalorder %s24, 0
      %p114 = por %p112, %p113
      %s116 = sadd.s32 %s115, 1
      %p119 = scmp.eq.s32.totalorder %s18, 3
      %p120 = scmp.ne.s32.totalorder %s115, %s117
      %p121 = scmp.eq.s32.totalorder %s18, 0
      %p122 = por %p120, %p121
      %p123 = scmp.ne.s32.totalorder %s115, %s117
      %p124 = scmp.eq.s32.totalorder %s23, 3
      %p125 = por %p123, %p124
      %p126 = scmp.ne.s32.totalorder %s117, %s118
      %p127 = scmp.eq.s32.totalorder %s23, 0
      %p128 = por %p126, %p127
      %p129 = scmp.ne.s32.totalorder %s117, %s118
      %p130 = scmp.eq.s32.totalorder %s24, 3
      %p131 = por %p129, %p130
      %p133 = scmp.ne.s32.totalorder %s118, %s132
      %p134 = scmp.eq.s32.totalorder %s24, 0
      %p135 = por %p133, %p134
      %s137 = sadd.s32 %s136, 1
      %p140 = scmp.eq.s32.totalorder %s18, 3
      %p141 = scmp.ne.s32.totalorder %s136, %s138
      %p142 = scmp.eq.s32.totalorder %s18, 0
      %p143 = por %p141, %p142
      %p144 = scmp.ne.s32.totalorder %s136, %s138
      %p145 = scmp.eq.s32.totalorder %s23, 3
      %p146 = por %p144, %p145
      %p147 = scmp.ne.s32.totalorder %s138, %s139
      %p148 = scmp.eq.s32.totalorder %s23, 0
      %p149 = por %p147, %p148
      %p150 = scmp.ne.s32.totalorder %s138, %s139
      %p151 = scmp.eq.s32.totalorder %s24, 3
      %p152 = por %p150, %p151
      %p154 = scmp.ne.s32.totalorder %s139, %s153
      %p155 = scmp.eq.s32.totalorder %s24, 0
      %p156 = por %p154, %p155
      %s158 = sadd.s32 %s157, 1
      %p161 = scmp.eq.s32.totalorder %s18, 3
      %p162 = scmp.ne.s32.totalorder %s157, %s159
      %p163 = scmp.eq.s32.totalorder %s18, 0
      %p164 = por %p162, %p163
      %p165 = scmp.ne.s32.totalorder %s157, %s159
      %p166 = scmp.eq.s32.totalorder %s23, 3
      %p167 = por %p165, %p166
      %p168 = scmp.ne.s32.totalorder %s159, %s160
      %p169 = scmp.eq.s32.totalorder %s23, 0
      %p170 = por %p168, %p169
      %p171 = scmp.ne.s32.totalorder %s159, %s160
      %p172 = scmp.eq.s32.totalorder %s24, 3
      %p173 = por %p171, %p172
      %p175 = scmp.ne.s32.totalorder %s160, %s174
      %p176 = scmp.eq.s32.totalorder %s24, 0
      %p177 = por %p175, %p176
      %s178 = ssub.s32 %s18, %s25
      %p179 = scmp.eq.s32.totalorder %s178, 0
      %s181 = sadd.s32 %s180, 1
      %s182 = scalar_select %p179, %s180, %s181
      %p185 = pneg %p179
      %p186 = scmp.eq.s32.totalorder %s18, 3
      %p187 = por %p185, %p186
      %p188 = scmp.ne.s32.totalorder %s180, %s183
      %p189 = scmp.eq.s32.totalorder %s18, 0
      %p190 = por %p188, %p189
      %p191 = scmp.ne.s32.totalorder %s180, %s183
      %p192 = scmp.eq.s32.totalorder %s23, 3
      %p193 = por %p191, %p192
      %p194 = scmp.ne.s32.totalorder %s183, %s184
      %p195 = scmp.eq.s32.totalorder %s23, 0
      %p196 = por %p194, %p195
      %p197 = scmp.ne.s32.totalorder %s183, %s184
      %p198 = scmp.eq.s32.totalorder %s24, 3
      %p199 = por %p197, %p198
      %p201 = scmp.ne.s32.totalorder %s184, %s200
      %p202 = scmp.eq.s32.totalorder %s24, 0
      %p203 = por %p201, %p202
      %p204 = scmp.le.s32.totalorder 1, %s18
      %p205 = scmp.lt.s32.totalorder %s18, 5
      %p206 = pnand %p204, %p205
      %p207 = pneg %p206
      // Predicated region
      $region9: #{tpu_custom_call.1} parent=5 // pred_check
        _
      $region10: #{tpu_custom_call.1} parent=5 // pred_check_branch
        %209 = sbr.rel (%p206) target = $region12
      $region11: #{tpu_custom_call.1} parent=5 // pred_region
        %s210 = ssub.s32 %s18, 1
        // Predicated region
        $region13: #{tpu_custom_call.1} parent=11 // pred_check
          %p211 = pneg %p65
        $region14: #{tpu_custom_call.1} parent=11 // pred_check_branch
          %213 = sbr.rel (%p211) target = $region16
        $region15: #{tpu_custom_call.1} parent=11 // pred_region
          _
        $region16: #{tpu_custom_call.1} parent=11 // pred_fallthru
          _
        // Predicated region
        $region17: #{tpu_custom_call.1} parent=11 // pred_check
          %p214 = pneg %p86
        $region18: #{tpu_custom_call.1} parent=11 // pred_check_branch
          %216 = sbr.rel (%p214) target = $region20
        $region19: #{tpu_custom_call.1} parent=11 // pred_region
          _
        $region20: #{tpu_custom_call.1} parent=11 // pred_fallthru
          _
        // Predicated region
        $region21: #{tpu_custom_call.1} parent=11 // pred_check
          %p217 = pneg %p107
        $region22: #{tpu_custom_call.1} parent=11 // pred_check_branch
          %219 = sbr.rel (%p217) target = $region24
        $region23: #{tpu_custom_call.1} parent=11 // pred_region
          _
        $region24: #{tpu_custom_call.1} parent=11 // pred_fallthru
          _
        // Predicated region
        $region25: #{tpu_custom_call.1} parent=11 // pred_check
          %p220 = pneg %p128
        $region26: #{tpu_custom_call.1} parent=11 // pred_check_branch
          %222 = sbr.rel (%p220) target = $region28
        $region27: #{tpu_custom_call.1} parent=11 // pred_region
          _
        $region28: #{tpu_custom_call.1} parent=11 // pred_fallthru
          _
        // Predicated region
        $region29: #{tpu_custom_call.1} parent=11 // pred_check
          %p223 = pneg %p149
        $region30: #{tpu_custom_call.1} parent=11 // pred_check_branch
          %225 = sbr.rel (%p223) target = $region32
        $region31: #{tpu_custom_call.1} parent=11 // pred_region
          _
        $region32: #{tpu_custom_call.1} parent=11 // pred_fallthru
          _
        // Predicated region
        $region33: #{tpu_custom_call.1} parent=11 // pred_check
          %p226 = pneg %p170
        $region34: #{tpu_custom_call.1} parent=11 // pred_check_branch
          %228 = sbr.rel (%p226) target = $region36
        $region35: #{tpu_custom_call.1} parent=11 // pred_region
          _
        $region36: #{tpu_custom_call.1} parent=11 // pred_fallthru
          _
      $region12: #{tpu_custom_call.1} parent=5 // pred_fallthru
        _
      %p229 = scmp.lt.s32.totalorder %s18, 4
      // Predicated region
      $region37: #{tpu_custom_call.1} parent=5 // pred_check
        %p230 = pneg %p229
      $region38: #{tpu_custom_call.1} parent=5 // pred_check_branch
        %232 = sbr.rel (%p230) target = $region40
      $region39: #{tpu_custom_call.1} parent=5 // pred_region
        // Predicated region
        $region41: #{tpu_custom_call.1} parent=39 // pred_check
          %p233 = pneg %p38
        $region42: #{tpu_custom_call.1} parent=39 // pred_check_branch
          %235 = sbr.rel (%p233) target = $region44
        $region43: #{tpu_custom_call.1} parent=39 // pred_region
          %s236 = smul.u32 32, %s18
          %s237 = ssub.s32 125, %s236
          %p238 = scmp.lt.s32.totalorder %s237, 32
          %s239 = scalar_select %p238, %s237, 32
          %s240 = smul.u32 64, %s239
          %p241 = scmp.lt.s32.totalorder %s236, 124
          %s242 = scalar_select %p241, %s236, 124
          %s243 = smul.addr %s242, 4
          %s244 = scalar_lea.vmem %s0, %s243
          %s245 = smul.u32 32, %s18
          %s246 = ssub.s32 125, %s245
          %p247 = scmp.lt.s32.totalorder %s246, 32
          %s248 = scalar_select %p247, %s246, 32
          %s249 = smul.u32 64, %s248
        $region44: #{tpu_custom_call.1} parent=39 // pred_fallthru
          _
      $region40: #{tpu_custom_call.1} parent=5 // pred_fallthru
        _
      %p250 = scmp.le.s32.totalorder 1, %s18
      %p251 = scmp.lt.s32.totalorder %s18, 5
      %p252 = pnand %p250, %p251
      %p253 = pneg %p252
      // Predicated region
      $region45: #{tpu_custom_call.1} parent=5 // pred_check
        _
      $region46: #{tpu_custom_call.1} parent=5 // pred_check_branch
        %255 = sbr.rel (%p252) target = $region48
      $region47: #{tpu_custom_call.1} parent=5 // pred_region
        %s256 = ssub.s32 %s18, 1
        %s257 = smul.u32 32, %s23
        %s258 = ssub.s32 125, %s257
        %p259 = scmp.lt.s32.totalorder %s258, 32
        %s260 = scalar_select %p259, %s258, 32
        %s261 = smul.u32 64, %s260
        %p262 = scmp.lt.s32.totalorder %s257, 124
        %s263 = scalar_select %p262, %s257, 124
        %s264 = smul.addr %s263, 4
        %s265 = scalar_lea.vmem %s0, %s264
        %p266 = pneg %p44
        %p267 = pneg %p41
        %p268 = pneg %p65
        %p269 = pneg %p62
        %p270 = pneg %p86
        %p271 = pneg %p83
        %p272 = pneg %p107
        %p273 = pneg %p104
        %p274 = pneg %p128
        %p275 = pneg %p125
        %p276 = pneg %p149
        %p277 = pneg %p146
        %p278 = pneg %p170
        %p279 = pneg %p167
        %p280 = pneg %p196
        %p281 = pneg %p193
        %s282 = sand.u32 %s183, 1
        %s283 = scalar_lea.sflag [#allocation4], %s282
        %s284 = sand.u32 %s183, 1
        %s285 = smul.addr %s284, 2
        %s286 = scalar_lea.vmem [#allocation3], %s285
        %s287 = smul.u32 32, %s23
        %s288 = ssub.s32 125, %s287
        %p289 = scmp.lt.s32.totalorder %s288, 32
        %s290 = scalar_select %p289, %s288, 32
        %s291 = smul.u32 64, %s290
        %p292 = scmp.lt.s32.totalorder %s287, 124
        %s293 = scalar_select %p292, %s287, 124
        %s294 = smul.addr %s293, 4
        %s295 = scalar_lea.vmem %s0, %s294
        %s296 = smul.u32 32, %s23
        %s297 = ssub.s32 125, %s296
        %p298 = scmp.lt.s32.totalorder %s297, 32
        %s299 = scalar_select %p298, %s297, 32
        %s300 = smul.u32 64, %s299
        %s301 = smul.u32 2, %s23
        %v303 = vld [vmem:[%s295] sm:$0xf]
        %v304 = vld [vmem:[%s295 + $0x4] sm:$0xf]
        %v305 = vld [vmem:[%s295 + $0x8] sm:$0xf]
        %v306 = vld [vmem:[%s295 + $0xc] sm:$0xf]
        %v307 = vld [vmem:[%s295 + $0x10] sm:$0xf]
        %v308 = vld [vmem:[%s295 + $0x14] sm:$0xf]
        %v309 = vld [vmem:[%s295 + $0x18] sm:$0xf]
        %v310 = vld [vmem:[%s295 + $0x1c] sm:$0xf]
        %v311 = vld [vmem:[%s295 + $0x20] sm:$0xf]
        %v312 = vld [vmem:[%s295 + $0x24] sm:$0xf]
        %v313 = vld [vmem:[%s295 + $0x28] sm:$0xf]
        %v314 = vld [vmem:[%s295 + $0x2c] sm:$0xf]
        %v315 = vld [vmem:[%s295 + $0x30] sm:$0xf]
        %v316 = vld [vmem:[%s295 + $0x34] sm:$0xf]
        %v317 = vld [vmem:[%s295 + $0x38] sm:$0xf]
        %v318 = vld [vmem:[%s295 + $0x3c] sm:$0xf]
        %v319 = vld [vmem:[%s295 + $0x40] sm:$0xf]
        %v320 = vld [vmem:[%s295 + $0x44] sm:$0xf]
        %v321 = vld [vmem:[%s295 + $0x48] sm:$0xf]
        %v322 = vld [vmem:[%s295 + $0x4c] sm:$0xf]
        %v323 = vld [vmem:[%s295 + $0x50] sm:$0xf]
        %v324 = vld [vmem:[%s295 + $0x54] sm:$0xf]
        %v325 = vld [vmem:[%s295 + $0x58] sm:$0xf]
        %v326 = vld [vmem:[%s295 + $0x5c] sm:$0xf]
        %v327 = vld [vmem:[%s295 + $0x60] sm:$0xf]
        %v328 = vld [vmem:[%s295 + $0x64] sm:$0xf]
        %v329 = vld [vmem:[%s295 + $0x68] sm:$0xf]
        %v330 = vld [vmem:[%s295 + $0x6c] sm:$0xf]
        %v331 = vld [vmem:[%s295 + $0x70] sm:$0xf]
        %v332 = vld [vmem:[%s295 + $0x74] sm:$0xf]
        %v333 = vld [vmem:[%s295 + $0x78] sm:$0xf]
        %v334 = vld [vmem:[%s295 + $0x7c] sm:$0xf]
        %v335 = vld [vmem:[%s1] sm:$0xf]
        %v336 = vld [vmem:[%s1 + $0x4] sm:$0xf]
        %v337 = vld [vmem:[%s1 + $0x8] sm:$0xf]
        %v338 = vld [vmem:[%s1 + $0xc] sm:$0xf]
        %v339 = vld [vmem:[%s2] sm:$0x1]
        %v341 = vlaneseq
        %v342 = vshrl.u32 %v341, 7
        %v343 = vsub.s32 0, %v342
        %v344 = vrot.slane %v339, %v343
        %v378 = vunpack.c.l.b16 %v303
        %v379 = vunpack.c.l.b16 %v304
        %v380 = vunpack.c.l.b16 %v305
        %v381 = vunpack.c.l.b16 %v306
        %v382 = vunpack.c.l.b16 %v307
        %v383 = vunpack.c.l.b16 %v308
        %v384 = vunpack.c.l.b16 %v309
        %v385 = vunpack.c.l.b16 %v310
        %v386 = vunpack.c.l.b16 %v311
        %v387 = vunpack.c.l.b16 %v312
        %v388 = vunpack.c.l.b16 %v313
        %v389 = vunpack.c.l.b16 %v314
        %v390 = vunpack.c.l.b16 %v315
        %v391 = vunpack.c.l.b16 %v316
        %v392 = vunpack.c.l.b16 %v317
        %v393 = vunpack.c.l.b16 %v318
        %v394 = vunpack.c.l.b16 %v319
        %v395 = vunpack.c.l.b16 %v320
        %v396 = vunpack.c.l.b16 %v321
        %v397 = vunpack.c.l.b16 %v322
        %v398 = vunpack.c.l.b16 %v323
        %v399 = vunpack.c.l.b16 %v324
        %v400 = vunpack.c.l.b16 %v325
        %v401 = vunpack.c.l.b16 %v326
        %v402 = vunpack.c.l.b16 %v327
        %v403 = vunpack.c.l.b16 %v328
        %v404 = vunpack.c.l.b16 %v329
        %v405 = vunpack.c.l.b16 %v330
        %v406 = vunpack.c.l.b16 %v331
        %v407 = vunpack.c.l.b16 %v332
        %v408 = vunpack.c.l.b16 %v333
        %v409 = vunpack.c.l.b16 %v334
        %v410 = vpack.c.b16 %v379, %v378
        %v411 = vpack.c.b16 %v381, %v380
        %v412 = vpack.c.b16 %v383, %v382
        %v413 = vpack.c.b16 %v385, %v384
        %v414 = vpack.c.b16 %v387, %v386
        %v415 = vpack.c.b16 %v389, %v388
        %v416 = vpack.c.b16 %v391, %v390
        %v417 = vpack.c.b16 %v393, %v392
        %v418 = vpack.c.b16 %v395, %v394
        %v419 = vpack.c.b16 %v397, %v396
        %v420 = vpack.c.b16 %v399, %v398
        %v421 = vpack.c.b16 %v401, %v400
        %v422 = vpack.c.b16 %v403, %v402
        %v423 = vpack.c.b16 %v405, %v404
        %v424 = vpack.c.b16 %v407, %v406
        %v425 = vpack.c.b16 %v409, %v408
        %v430 = vunpack.c.l.b16 %v335
        %v431 = vunpack.c.l.b16 %v336
        %v432 = vunpack.c.l.b16 %v337
        %v433 = vunpack.c.l.b16 %v338
        %v434 = vpack.c.b16 %v431, %v430
        %v435 = vpack.c.b16 %v433, %v432
        %vm438 = vcmask 261120
        %v440 = vsel %vm438, %v410, 0
        %v443 = vsel %vm438, %v411, 0
        %v446 = vsel %vm438, %v412, 0
        %v449 = vsel %vm438, %v413, 0
        %v452 = vsel %vm438, %v414, 0
        %v455 = vsel %vm438, %v415, 0
        %v458 = vsel %vm438, %v416, 0
        %v461 = vsel %vm438, %v417, 0
        %v464 = vsel %vm438, %v418, 0
        %v467 = vsel %vm438, %v419, 0
        %v470 = vsel %vm438, %v420, 0
        %v473 = vsel %vm438, %v421, 0
        %v476 = vsel %vm438, %v422, 0
        %v479 = vsel %vm438, %v423, 0
        %v482 = vsel %vm438, %v424, 0
        %v485 = vsel %vm438, %v425, 0
        %487 = vmatprep.subr.bf16.mxu0 0
        %488 = vmatpush1.bf16.msra.mxu0 %v434
        %489 = vmatprep.subr.bf16.mxu0 0
        %490 = vmatpush1.bf16.msra.mxu0 %v435
        %491 = vmatprep.subr.bf16.mxu0 0
        %492 = vmatpush1.bf16.msra.mxu0 0
        %493 = vmatprep.subr.bf16.mxu0 0
        %494 = vmatpush1.bf16.msra.mxu0 0
        %495 = vmatprep.subr.bf16.mxu0 0
        %496 = vmatpush1.bf16.msra.mxu0 0
        %497 = vmatprep.subr.bf16.mxu0 0
        %498 = vmatpush1.bf16.msra.mxu0 0
        %499 = vmatprep.subr.bf16.mxu0 0
        %500 = vmatpush1.bf16.msra.mxu0 0
        %501 = vmatprep.subr.bf16.mxu0 0
        %502 = vmatpush1.bf16.msra.mxu0 0
        %503 = vmatprep.subr.bf16.mxu0 0
        %504 = vmatpush1.bf16.msra.mxu0 0
        %505 = vmatprep.subr.bf16.mxu0 0
        %506 = vmatpush1.bf16.msra.mxu0 0
        %507 = vmatprep.subr.bf16.mxu0 0
        %508 = vmatpush1.bf16.msra.mxu0 0
        %509 = vmatprep.subr.bf16.mxu0 0
        %510 = vmatpush1.bf16.msra.mxu0 0
        %511 = vmatprep.subr.bf16.mxu0 0
        %512 = vmatpush1.bf16.msra.mxu0 0
        %513 = vmatprep.subr.bf16.mxu0 0
        %514 = vmatpush1.bf16.msra.mxu0 0
        %515 = vmatprep.subr.bf16.mxu0 0
        %516 = vmatpush1.bf16.msra.mxu0 0
        %517 = vmatprep.subr.bf16.mxu0 0
        %518 = vmatpush1.bf16.msra.mxu0 0
        %519 = vmatprep.mubr.bf16.mxu0 0
        %520 = vmatmul.mubr.bf16.gmra.mrb[0].mxu0 %v440
        %v521 = vpop.f32.mrb[0].mxu0
        %v522 = vadd.f32 %v344, %v521
        %v523 = vpop.f32.mrb[0].mxu0
        %v524 = vpop.f32.mrb[0].mxu0
        %v525 = vadd.f32 %v344, %v524
        %v526 = vpop.f32.mrb[0].mxu0
        %527 = vmatprep.mubr.bf16.mxu0 0
        %528 = vmatmul.mubr.bf16.gmra.mrb[0].mxu0 %v443
        %v529 = vpop.f32.mrb[0].mxu0
        %v530 = vadd.f32 %v344, %v529
        %v531 = vpop.f32.mrb[0].mxu0
        %v532 = vpop.f32.mrb[0].mxu0
        %v533 = vadd.f32 %v344, %v532
        %v534 = vpop.f32.mrb[0].mxu0
        %535 = vmatprep.mubr.bf16.mxu0 0
        %536 = vmatmul.mubr.bf16.gmra.mrb[0].mxu0 %v446
        %v537 = vpop.f32.mrb[0].mxu0
        %v538 = vadd.f32 %v344, %v537
        %v539 = vpop.f32.mrb[0].mxu0
        %v540 = vpop.f32.mrb[0].mxu0
        %v541 = vadd.f32 %v344, %v540
        %v542 = vpop.f32.mrb[0].mxu0
        %543 = vmatprep.mubr.bf16.mxu0 0
        %544 = vmatmul.mubr.bf16.gmra.mrb[0].mxu0 %v449
        %v545 = vpop.f32.mrb[0].mxu0
        %v546 = vadd.f32 %v344, %v545
        %v547 = vpop.f32.mrb[0].mxu0
        %v548 = vpop.f32.mrb[0].mxu0
        %v549 = vadd.f32 %v344, %v548
        %v550 = vpop.f32.mrb[0].mxu0
        %551 = vmatprep.mubr.bf16.mxu0 0
        %552 = vmatmul.mubr.bf16.gmra.mrb[0].mxu0 %v452
        %v553 = vpop.f32.mrb[0].mxu0
        %v554 = vadd.f32 %v344, %v553
        %v555 = vpop.f32.mrb[0].mxu0
        %v556 = vpop.f32.mrb[0].mxu0
        %v557 = vadd.f32 %v344, %v556
        %v558 = vpop.f32.mrb[0].mxu0
        %559 = vmatprep.mubr.bf16.mxu0 0
        %560 = vmatmul.mubr.bf16.gmra.mrb[0].mxu0 %v455
        %v561 = vpop.f32.mrb[0].mxu0
        %v562 = vadd.f32 %v344, %v561
        %v563 = vpop.f32.mrb[0].mxu0
        %v564 = vpop.f32.mrb[0].mxu0
        %v565 = vadd.f32 %v344, %v564
        %v566 = vpop.f32.mrb[0].mxu0
        %567 = vmatprep.mubr.bf16.mxu0 0
        %568 = vmatmul.mubr.bf16.gmra.mrb[0].mxu0 %v458
        %v569 = vpop.f32.mrb[0].mxu0
        %v570 = vadd.f32 %v344, %v569
        %v571 = vpop.f32.mrb[0].mxu0
        %v572 = vpop.f32.mrb[0].mxu0
        %v573 = vadd.f32 %v344, %v572
        %v574 = vpop.f32.mrb[0].mxu0
        %575 = vmatprep.mubr.bf16.mxu0 0
        %576 = vmatmul.mubr.bf16.gmra.mrb[0].mxu0 %v461
        %v577 = vpop.f32.mrb[0].mxu0
        %v578 = vadd.f32 %v344, %v577
        %v579 = vpop.f32.mrb[0].mxu0
        %v580 = vpop.f32.mrb[0].mxu0
        %v581 = vadd.f32 %v344, %v580
        %v582 = vpop.f32.mrb[0].mxu0
        %583 = vmatprep.mubr.bf16.mxu0 0
        %584 = vmatmul.mubr.bf16.gmra.mrb[0].mxu0 %v464
        %v585 = vpop.f32.mrb[0].mxu0
        %v586 = vadd.f32 %v344, %v585
        %v587 = vpop.f32.mrb[0].mxu0
        %v588 = vpop.f32.mrb[0].mxu0
        %v589 = vadd.f32 %v344, %v588
        %v590 = vpop.f32.mrb[0].mxu0
        %591 = vmatprep.mubr.bf16.mxu0 0
        %592 = vmatmul.mubr.bf16.gmra.mrb[0].mxu0 %v467
        %v593 = vpop.f32.mrb[0].mxu0
        %v594 = vadd.f32 %v344, %v593
        %v595 = vpop.f32.mrb[0].mxu0
        %v596 = vpop.f32.mrb[0].mxu0
        %v597 = vadd.f32 %v344, %v596
        %v598 = vpop.f32.mrb[0].mxu0
        %599 = vmatprep.mubr.bf16.mxu0 0
        %600 = vmatmul.mubr.bf16.gmra.mrb[0].mxu0 %v470
        %v601 = vpop.f32.mrb[0].mxu0
        %v602 = vadd.f32 %v344, %v601
        %v603 = vpop.f32.mrb[0].mxu0
        %v604 = vpop.f32.mrb[0].mxu0
        %v605 = vadd.f32 %v344, %v604
        %v606 = vpop.f32.mrb[0].mxu0
        %607 = vmatprep.mubr.bf16.mxu0 0
        %608 = vmatmul.mubr.bf16.gmra.mrb[0].mxu0 %v473
        %v609 = vpop.f32.mrb[0].mxu0
        %v610 = vadd.f32 %v344, %v609
        %v611 = vpop.f32.mrb[0].mxu0
        %v612 = vpop.f32.mrb[0].mxu0
        %v613 = vadd.f32 %v344, %v612
        %v614 = vpop.f32.mrb[0].mxu0
        %615 = vmatprep.mubr.bf16.mxu0 0
        %616 = vmatmul.mubr.bf16.gmra.mrb[0].mxu0 %v476
        %v617 = vpop.f32.mrb[0].mxu0
        %v618 = vadd.f32 %v344, %v617
        %v619 = vpop.f32.mrb[0].mxu0
        %v620 = vpop.f32.mrb[0].mxu0
        %v621 = vadd.f32 %v344, %v620
        %v622 = vpop.f32.mrb[0].mxu0
        %623 = vmatprep.mubr.bf16.mxu0 0
        %624 = vmatmul.mubr.bf16.gmra.mrb[0].mxu0 %v479
        %v625 = vpop.f32.mrb[0].mxu0
        %v626 = vadd.f32 %v344, %v625
        %v627 = vpop.f32.mrb[0].mxu0
        %v628 = vpop.f32.mrb[0].mxu0
        %v629 = vadd.f32 %v344, %v628
        %v630 = vpop.f32.mrb[0].mxu0
        %631 = vmatprep.mubr.bf16.mxu0 0
        %632 = vmatmul.mubr.bf16.gmra.mrb[0].mxu0 %v482
        %v633 = vpop.f32.mrb[0].mxu0
        %v634 = vadd.f32 %v344, %v633
        %v635 = vpop.f32.mrb[0].mxu0
        %v636 = vpop.f32.mrb[0].mxu0
        %v637 = vadd.f32 %v344, %v636
        %v638 = vpop.f32.mrb[0].mxu0
        %639 = vmatprep.mubr.bf16.mxu0 0
        %640 = vmatmul.mubr.bf16.gmra.mrb[0].mxu0 %v485
        %v641 = vpop.f32.mrb[0].mxu0
        %v642 = vadd.f32 %v344, %v641
        %v643 = vpop.f32.mrb[0].mxu0
        %v644 = vpop.f32.mrb[0].mxu0
        %v645 = vadd.f32 %v344, %v644
        %v646 = vpop.f32.mrb[0].mxu0
        %647 = vdwg.mxu0
        %v648 = vmax.f32 %v522, 0.0
        %v649 = vmax.f32 %v525, 0.0
        %v650 = vmax.f32 %v530, 0.0
        %v651 = vmax.f32 %v533, 0.0
        %v652 = vmax.f32 %v538, 0.0
        %v653 = vmax.f32 %v541, 0.0
        %v654 = vmax.f32 %v546, 0.0
        %v655 = vmax.f32 %v549, 0.0
        %v656 = vmax.f32 %v554, 0.0
        %v657 = vmax.f32 %v557, 0.0
        %v658 = vmax.f32 %v562, 0.0
        %v659 = vmax.f32 %v565, 0.0
        %v660 = vmax.f32 %v570, 0.0
        %v661 = vmax.f32 %v573, 0.0
        %v662 = vmax.f32 %v578, 0.0
        %v663 = vmax.f32 %v581, 0.0
        %v664 = vmax.f32 %v586, 0.0
        %v665 = vmax.f32 %v589, 0.0
        %v666 = vmax.f32 %v594, 0.0
        %v667 = vmax.f32 %v597, 0.0
        %v668 = vmax.f32 %v602, 0.0
        %v669 = vmax.f32 %v605, 0.0
        %v670 = vmax.f32 %v610, 0.0
        %v671 = vmax.f32 %v613, 0.0
        %v672 = vmax.f32 %v618, 0.0
        %v673 = vmax.f32 %v621, 0.0
        %v674 = vmax.f32 %v626, 0.0
        %v675 = vmax.f32 %v629, 0.0
        %v676 = vmax.f32 %v634, 0.0
        %v677 = vmax.f32 %v637, 0.0
        %v678 = vmax.f32 %v642, 0.0
        %v679 = vmax.f32 %v645, 0.0
        %v680 = vpack.c.bf16 %v649, %v648
        %v681 = vpack.c.bf16 %v651, %v650
        %v682 = vpack.c.bf16 %v653, %v652
        %v683 = vpack.c.bf16 %v655, %v654
        %v684 = vpack.c.bf16 %v657, %v656
        %v685 = vpack.c.bf16 %v659, %v658
        %v686 = vpack.c.bf16 %v661, %v660
        %v687 = vpack.c.bf16 %v663, %v662
        %v688 = vpack.c.bf16 %v665, %v664
        %v689 = vpack.c.bf16 %v667, %v666
        %v690 = vpack.c.bf16 %v669, %v668
        %v691 = vpack.c.bf16 %v671, %v670
        %v692 = vpack.c.bf16 %v673, %v672
        %v693 = vpack.c.bf16 %v675, %v674
        %v694 = vpack.c.bf16 %v677, %v676
        %v695 = vpack.c.bf16 %v679, %v678
        %v696 = vld [vmem:[%s3] sm:$0xf]
        %v697 = vld [vmem:[%s3 + $0x4] sm:$0xf]
        %v698 = vld [vmem:[%s3 + $0x8] sm:$0xf]
        %v699 = vld [vmem:[%s3 + $0xc] sm:$0xf]
        %v700 = vld [vmem:[%s3 + $0x10] sm:$0xf]
        %v701 = vld [vmem:[%s3 + $0x14] sm:$0xf]
        %v702 = vld [vmem:[%s3 + $0x18] sm:$0xf]
        %v703 = vld [vmem:[%s3 + $0x1c] sm:$0xf]
        %v704 = vld [vmem:[%s3 + $0x20] sm:$0xf]
        %v705 = vld [vmem:[%s3 + $0x24] sm:$0xf]
        %v706 = vld [vmem:[%s3 + $0x28] sm:$0xf]
        %v707 = vld [vmem:[%s3 + $0x2c] sm:$0xf]
        %v708 = vld [vmem:[%s3 + $0x30] sm:$0xf]
        %v709 = vld [vmem:[%s3 + $0x34] sm:$0xf]
        %v710 = vld [vmem:[%s3 + $0x38] sm:$0xf]
        %v711 = vld [vmem:[%s3 + $0x3c] sm:$0xf]
        %v712 = vld [vmem:[%s4] sm:$0x1]
        %v714 = vlaneseq
        %v715 = vshrl.u32 %v714, 7
        %v716 = vsub.s32 0, %v715
        %v717 = vrot.slane %v712, %v716
        %v735 = vunpack.c.l.b16 %v696
        %v736 = vunpack.c.l.b16 %v697
        %v737 = vunpack.c.l.b16 %v698
        %v738 = vunpack.c.l.b16 %v699
        %v739 = vunpack.c.l.b16 %v700
        %v740 = vunpack.c.l.b16 %v701
        %v741 = vunpack.c.l.b16 %v702
        %v742 = vunpack.c.l.b16 %v703
        %v743 = vunpack.c.l.b16 %v704
        %v744 = vunpack.c.l.b16 %v705
        %v745 = vunpack.c.l.b16 %v706
        %v746 = vunpack.c.l.b16 %v707
        %v747 = vunpack.c.l.b16 %v708
        %v748 = vunpack.c.l.b16 %v709
        %v749 = vunpack.c.l.b16 %v710
        %v750 = vunpack.c.l.b16 %v711
        %v751 = vpack.c.b16 %v736, %v735
        %v752 = vpack.c.b16 %v738, %v737
        %v753 = vpack.c.b16 %v740, %v739
        %v754 = vpack.c.b16 %v742, %v741
        %v755 = vpack.c.b16 %v744, %v743
        %v756 = vpack.c.b16 %v746, %v745
        %v757 = vpack.c.b16 %v748, %v747
        %v758 = vpack.c.b16 %v750, %v749
        %767 = vmatprep.subr.bf16.mxu0 0
        %768 = vmatpush1.bf16.msra.mxu0 %v751
        %769 = vmatprep.subr.bf16.mxu0 0
        %770 = vmatpush1.bf16.msra.mxu0 %v752
        %771 = vmatprep.subr.bf16.mxu0 0
        %772 = vmatpush1.bf16.msra.mxu0 %v753
        %773 = vmatprep.subr.bf16.mxu0 0
        %774 = vmatpush1.bf16.msra.mxu0 %v754
        %775 = vmatprep.subr.bf16.mxu0 0
        %776 = vmatpush1.bf16.msra.mxu0 %v755
        %777 = vmatprep.subr.bf16.mxu0 0
        %778 = vmatpush1.bf16.msra.mxu0 %v756
        %779 = vmatprep.subr.bf16.mxu0 0
        %780 = vmatpush1.bf16.msra.mxu0 %v757
        %781 = vmatprep.subr.bf16.mxu0 0
        %782 = vmatpush1.bf16.msra.mxu0 %v758
        %783 = vmatprep.subr.bf16.mxu0 0
        %784 = vmatpush1.bf16.msra.mxu0 0
        %785 = vmatprep.subr.bf16.mxu0 0
        %786 = vmatpush1.bf16.msra.mxu0 0
        %787 = vmatprep.subr.bf16.mxu0 0
        %788 = vmatpush1.bf16.msra.mxu0 0
        %789 = vmatprep.subr.bf16.mxu0 0
        %790 = vmatpush1.bf16.msra.mxu0 0
        %791 = vmatprep.subr.bf16.mxu0 0
        %792 = vmatpush1.bf16.msra.mxu0 0
        %793 = vmatprep.subr.bf16.mxu0 0
        %794 = vmatpush1.bf16.msra.mxu0 0
        %795 = vmatprep.subr.bf16.mxu0 0
        %796 = vmatpush1.bf16.msra.mxu0 0
        %797 = vmatprep.subr.bf16.mxu0 0
        %798 = vmatpush1.bf16.msra.mxu0 0
        %799 = vmatprep.mubr.bf16.mxu0 0
        %800 = vmatmul.mubr.bf16.gmra.mrb[0].mxu0 %v680
        %v801 = vpop.f32.mrb[0].mxu0
        %v802 = vadd.f32 %v717, %v801
        %v803 = vpop.f32.mrb[0].mxu0
        %v804 = vpop.f32.mrb[0].mxu0
        %v805 = vadd.f32 %v717, %v804
        %v806 = vpop.f32.mrb[0].mxu0
        %807 = vmatprep.mubr.bf16.mxu0 0
        %808 = vmatmul.mubr.bf16.gmra.mrb[0].mxu0 %v681
        %v809 = vpop.f32.mrb[0].mxu0
        %v810 = vadd.f32 %v717, %v809
        %v811 = vpop.f32.mrb[0].mxu0
        %v812 = vpop.f32.mrb[0].mxu0
        %v813 = vadd.f32 %v717, %v812
        %v814 = vpop.f32.mrb[0].mxu0
        %815 = vmatprep.mubr.bf16.mxu0 0
        %816 = vmatmul.mubr.bf16.gmra.mrb[0].mxu0 %v682
        %v817 = vpop.f32.mrb[0].mxu0
        %v818 = vadd.f32 %v717, %v817
        %v819 = vpop.f32.mrb[0].mxu0
        %v820 = vpop.f32.mrb[0].mxu0
        %v821 = vadd.f32 %v717, %v820
        %v822 = vpop.f32.mrb[0].mxu0
        %823 = vmatprep.mubr.bf16.mxu0 0
        %824 = vmatmul.mubr.bf16.gmra.mrb[0].mxu0 %v683
        %v825 = vpop.f32.mrb[0].mxu0
        %v826 = vadd.f32 %v717, %v825
        %v827 = vpop.f32.mrb[0].mxu0
        %v828 = vpop.f32.mrb[0].mxu0
        %v829 = vadd.f32 %v717, %v828
        %v830 = vpop.f32.mrb[0].mxu0
        %831 = vmatprep.mubr.bf16.mxu0 0
        %832 = vmatmul.mubr.bf16.gmra.mrb[0].mxu0 %v684
        %v833 = vpop.f32.mrb[0].mxu0
        %v834 = vadd.f32 %v717, %v833
        %v835 = vpop.f32.mrb[0].mxu0
        %v836 = vpop.f32.mrb[0].mxu0
        %v837 = vadd.f32 %v717, %v836
        %v838 = vpop.f32.mrb[0].mxu0
        %839 = vmatprep.mubr.bf16.mxu0 0
        %840 = vmatmul.mubr.bf16.gmra.mrb[0].mxu0 %v685
        %v841 = vpop.f32.mrb[0].mxu0
        %v842 = vadd.f32 %v717, %v841
        %v843 = vpop.f32.mrb[0].mxu0
        %v844 = vpop.f32.mrb[0].mxu0
        %v845 = vadd.f32 %v717, %v844
        %v846 = vpop.f32.mrb[0].mxu0
        %847 = vmatprep.mubr.bf16.mxu0 0
        %848 = vmatmul.mubr.bf16.gmra.mrb[0].mxu0 %v686
        %v849 = vpop.f32.mrb[0].mxu0
        %v850 = vadd.f32 %v717, %v849
        %v851 = vpop.f32.mrb[0].mxu0
        %v852 = vpop.f32.mrb[0].mxu0
        %v853 = vadd.f32 %v717, %v852
        %v854 = vpop.f32.mrb[0].mxu0
        %855 = vmatprep.mubr.bf16.mxu0 0
        %856 = vmatmul.mubr.bf16.gmra.mrb[0].mxu0 %v687
        %v857 = vpop.f32.mrb[0].mxu0
        %v858 = vadd.f32 %v717, %v857
        %v859 = vpop.f32.mrb[0].mxu0
        %v860 = vpop.f32.mrb[0].mxu0
        %v861 = vadd.f32 %v717, %v860
        %v862 = vpop.f32.mrb[0].mxu0
        %863 = vmatprep.mubr.bf16.mxu0 0
        %864 = vmatmul.mubr.bf16.gmra.mrb[0].mxu0 %v688
        %v865 = vpop.f32.mrb[0].mxu0
        %v866 = vadd.f32 %v717, %v865
        %v867 = vpop.f32.mrb[0].mxu0
        %v868 = vpop.f32.mrb[0].mxu0
        %v869 = vadd.f32 %v717, %v868
        %v870 = vpop.f32.mrb[0].mxu0
        %871 = vmatprep.mubr.bf16.mxu0 0
        %872 = vmatmul.mubr.bf16.gmra.mrb[0].mxu0 %v689
        %v873 = vpop.f32.mrb[0].mxu0
        %v874 = vadd.f32 %v717, %v873
        %v875 = vpop.f32.mrb[0].mxu0
        %v876 = vpop.f32.mrb[0].mxu0
        %v877 = vadd.f32 %v717, %v876
        %v878 = vpop.f32.mrb[0].mxu0
        %879 = vmatprep.mubr.bf16.mxu0 0
        %880 = vmatmul.mubr.bf16.gmra.mrb[0].mxu0 %v690
        %v881 = vpop.f32.mrb[0].mxu0
        %v882 = vadd.f32 %v717, %v881
        %v883 = vpop.f32.mrb[0].mxu0
        %v884 = vpop.f32.mrb[0].mxu0
        %v885 = vadd.f32 %v717, %v884
        %v886 = vpop.f32.mrb[0].mxu0
        %887 = vmatprep.mubr.bf16.mxu0 0
        %888 = vmatmul.mubr.bf16.gmra.mrb[0].mxu0 %v691
        %v889 = vpop.f32.mrb[0].mxu0
        %v890 = vadd.f32 %v717, %v889
        %v891 = vpop.f32.mrb[0].mxu0
        %v892 = vpop.f32.mrb[0].mxu0
        %v893 = vadd.f32 %v717, %v892
        %v894 = vpop.f32.mrb[0].mxu0
        %895 = vmatprep.mubr.bf16.mxu0 0
        %896 = vmatmul.mubr.bf16.gmra.mrb[0].mxu0 %v692
        %v897 = vpop.f32.mrb[0].mxu0
        %v898 = vadd.f32 %v717, %v897
        %v899 = vpop.f32.mrb[0].mxu0
        %v900 = vpop.f32.mrb[0].mxu0
        %v901 = vadd.f32 %v717, %v900
        %v902 = vpop.f32.mrb[0].mxu0
        %903 = vmatprep.mubr.bf16.mxu0 0
        %904 = vmatmul.mubr.bf16.gmra.mrb[0].mxu0 %v693
        %v905 = vpop.f32.mrb[0].mxu0
        %v906 = vadd.f32 %v717, %v905
        %v907 = vpop.f32.mrb[0].mxu0
        %v908 = vpop.f32.mrb[0].mxu0
        %v909 = vadd.f32 %v717, %v908
        %v910 = vpop.f32.mrb[0].mxu0
        %911 = vmatprep.mubr.bf16.mxu0 0
        %912 = vmatmul.mubr.bf16.gmra.mrb[0].mxu0 %v694
        %v913 = vpop.f32.mrb[0].mxu0
        %v914 = vadd.f32 %v717, %v913
        %v915 = vpop.f32.mrb[0].mxu0
        %v916 = vpop.f32.mrb[0].mxu0
        %v917 = vadd.f32 %v717, %v916
        %v918 = vpop.f32.mrb[0].mxu0
        %919 = vmatprep.mubr.bf16.mxu0 0
        %920 = vmatmul.mubr.bf16.gmra.mrb[0].mxu0 %v695
        %v921 = vpop.f32.mrb[0].mxu0
        %v922 = vadd.f32 %v717, %v921
        %v923 = vpop.f32.mrb[0].mxu0
        %v924 = vpop.f32.mrb[0].mxu0
        %v925 = vadd.f32 %v717, %v924
        %v926 = vpop.f32.mrb[0].mxu0
        %927 = vdwg.mxu0
        %v928 = vmax.f32 %v802, 0.0
        %v929 = vmax.f32 %v805, 0.0
        %v930 = vmax.f32 %v810, 0.0
        %v931 = vmax.f32 %v813, 0.0
        %v932 = vmax.f32 %v818, 0.0
        %v933 = vmax.f32 %v821, 0.0
        %v934 = vmax.f32 %v826, 0.0
        %v935 = vmax.f32 %v829, 0.0
        %v936 = vmax.f32 %v834, 0.0
        %v937 = vmax.f32 %v837, 0.0
        %v938 = vmax.f32 %v842, 0.0
        %v939 = vmax.f32 %v845, 0.0
        %v940 = vmax.f32 %v850, 0.0
        %v941 = vmax.f32 %v853, 0.0
        %v942 = vmax.f32 %v858, 0.0
        %v943 = vmax.f32 %v861, 0.0
        %v944 = vmax.f32 %v866, 0.0
        %v945 = vmax.f32 %v869, 0.0
        %v946 = vmax.f32 %v874, 0.0
        %v947 = vmax.f32 %v877, 0.0
        %v948 = vmax.f32 %v882, 0.0
        %v949 = vmax.f32 %v885, 0.0
        %v950 = vmax.f32 %v890, 0.0
        %v951 = vmax.f32 %v893, 0.0
        %v952 = vmax.f32 %v898, 0.0
        %v953 = vmax.f32 %v901, 0.0
        %v954 = vmax.f32 %v906, 0.0
        %v955 = vmax.f32 %v909, 0.0
        %v956 = vmax.f32 %v914, 0.0
        %v957 = vmax.f32 %v917, 0.0
        %v958 = vmax.f32 %v922, 0.0
        %v959 = vmax.f32 %v925, 0.0
        %v960 = vld [vmem:[%s5] sm:$0x1]
        %v961 = vld [vmem:[#allocation2] sm:$0x1]
        %963 = vset.pattern.permute.xlu0 0
        %964 = vperm.xlu0 %963, %v961
        %v965 = vpop.permute.xlu0 %964
        %v967 = vlaneseq
        %v968 = vshrl.u32 %v967, 7
        %v969 = vsub.s32 0, %v968
        %v970 = vrot.slane %v965, %v969
        %971 = vmatprep.subr.mxu0 0.0
        %972 = vmatpush1.xpose.msra.mxu0 %v928
        %973 = vmatprep.subr.mxu0 0.0
        %974 = vmatpush1.xpose.msra.mxu0 %v929
        %975 = vmatprep.subr.mxu0 0.0
        %976 = vmatpush1.xpose.msra.mxu0 %v930
        %977 = vmatprep.subr.mxu0 0.0
        %978 = vmatpush1.xpose.msra.mxu0 %v931
        %979 = vmatprep.subr.mxu0 0.0
        %980 = vmatpush1.xpose.msra.mxu0 %v932
        %981 = vmatprep.subr.mxu0 0.0
        %982 = vmatpush1.xpose.msra.mxu0 %v933
        %983 = vmatprep.subr.mxu0 0.0
        %984 = vmatpush1.xpose.msra.mxu0 %v934
        %985 = vmatprep.subr.mxu0 0.0
        %986 = vmatpush1.xpose.msra.mxu0 %v935
        %987 = vmatprep.subr.mxu0 0.0
        %988 = vmatpush1.xpose.msra.mxu0 %v936
        %989 = vmatprep.subr.mxu0 0.0
        %990 = vmatpush1.xpose.msra.mxu0 %v937
        %991 = vmatprep.subr.mxu0 0.0
        %992 = vmatpush1.xpose.msra.mxu0 %v938
        %993 = vmatprep.subr.mxu0 0.0
        %994 = vmatpush1.xpose.msra.mxu0 %v939
        %995 = vmatprep.subr.mxu0 0.0
        %996 = vmatpush1.xpose.msra.mxu0 %v940
        %997 = vmatprep.subr.mxu0 0.0
        %998 = vmatpush1.xpose.msra.mxu0 %v941
        %999 = vmatprep.subr.mxu0 0.0
        %1000 = vmatpush1.xpose.msra.mxu0 %v942
        %1001 = vmatprep.subr.mxu0 0.0
        %1002 = vmatpush1.xpose.msra.mxu0 %v943
        %1003 = vmatprep.subr.mxu0 0.0
        %1004 = vmatpush1.xpose.msra.mxu0 %v944
        %1005 = vmatprep.subr.mxu0 0.0
        %1006 = vmatpush1.xpose.msra.mxu0 %v945
        %1007 = vmatprep.subr.mxu0 0.0
        %1008 = vmatpush1.xpose.msra.mxu0 %v946
        %1009 = vmatprep.subr.mxu0 0.0
        %1010 = vmatpush1.xpose.msra.mxu0 %v947
        %1011 = vmatprep.subr.mxu0 0.0
        %1012 = vmatpush1.xpose.msra.mxu0 %v948
        %1013 = vmatprep.subr.mxu0 0.0
        %1014 = vmatpush1.xpose.msra.mxu0 %v949
        %1015 = vmatprep.subr.mxu0 0.0
        %1016 = vmatpush1.xpose.msra.mxu0 %v950
        %1017 = vmatprep.subr.mxu0 0.0
        %1018 = vmatpush1.xpose.msra.mxu0 %v951
        %1019 = vmatprep.subr.mxu0 0.0
        %1020 = vmatpush1.xpose.msra.mxu0 %v952
        %1021 = vmatprep.subr.mxu0 0.0
        %1022 = vmatpush1.xpose.msra.mxu0 %v953
        %1023 = vmatprep.subr.mxu0 0.0
        %1024 = vmatpush1.xpose.msra.mxu0 %v954
        %1025 = vmatprep.subr.mxu0 0.0
        %1026 = vmatpush1.xpose.msra.mxu0 %v955
        %1027 = vmatprep.subr.mxu0 0.0
        %1028 = vmatpush1.xpose.msra.mxu0 %v956
        %1029 = vmatprep.subr.mxu0 0.0
        %1030 = vmatpush1.xpose.msra.mxu0 %v957
        %1031 = vmatprep.subr.mxu0 0.0
        %1032 = vmatpush1.xpose.msra.mxu0 %v958
        %1033 = vmatprep.subr.mxu0 0.0
        %1034 = vmatpush1.xpose.msra.mxu0 %v959
        %1035 = vmatprep.mubr.f32.mxu0 0.0
        %1036 = vmatmul.mubr.f32.gmra.mrb[0].mxu0 %v960
        %v1037 = vpop.f32.mrb[0].mxu0
        %v1038 = vadd.f32 %v970, %v1037
        %v1039 = vpop.f32.mrb[0].mxu0
        %v1040 = vadd.f32 %v970, %v1039
        %1041 = vdwg.mxu0
        %v1044 = vcombine.low %v1038, %v1040
        %v1046 = vunpack.c.l.s4 1966171168
        %v1047 = vunpack.c.0.s8 %v1046
        %v1048 = vlaneseq
        %v1049 = vshrl.u32 %v1048, 7
        %v1050 = vsub.s32 %v1047, %v1049
        %v1051 = vrot.slane %v1044, %v1050
        %v1053 = vunpack.c.l.s4 1966171168
        %v1054 = vunpack.c.0.s8 %v1053
        %v1055 = vlaneseq
        %v1056 = vshrl.u32 %v1055, 7
        %v1057 = vsub.s32 %v1054, %v1056
        %v1058 = vrot.slane %v1051, %v1057
        %v1060 = vlaneseq
        %vm1061 = vcmp.ge.s32.totalorder %v1060, 0
        %vm1062 = vcmp.lt.s32.totalorder %v1060, 256
        %vm1063 = vmand %vm1061, %vm1062
        %1064 = vst.msk [vmem:[%s286] sm:$0x3] %vm1063, %v1058
        %s1065 = sand.u32 %s183, 1
        %s1066 = scalar_lea.sflag [#allocation4], %s1065
        %s1067 = sand.u32 %s183, 1
        %s1068 = smul.addr %s1067, 2
        %s1069 = scalar_lea.vmem [#allocation3], %s1068
        // Predicated region
        $region49: #{tpu_custom_call.1} parent=47 // pred_check
          %p1070 = pneg %p193
        $region50: #{tpu_custom_call.1} parent=47 // pred_check_branch
          %1072 = sbr.rel (%p1070) target = $region52
        $region51: #{tpu_custom_call.1} parent=47 // pred_region
          %s1073 = smul.u32 2, %s23
          %s1075 = ssub.s32 32, 32
          %1076 = vsyncadd %s1066, %s1075
          %s1077 = smul.addr %s1073, 16
          %s1078 = scalar_lea.hbm %s7, %s1077
          %s1080 = sshll.u32 %s1069, 4
          %s1081 = int_to_ptr.vmem [resolvable:$true] %s1080
          %1083 = dma.vmem_to_hbm [thread:$0]  %s1081, 32, %s1078, %s1066
        $region52: #{tpu_custom_call.1} parent=47 // pred_fallthru
          _
      $region48: #{tpu_custom_call.1} parent=5 // pred_fallthru
        _
      %p1084 = scmp.le.s32.totalorder 2, %s18
      // Predicated region
      $region53: #{tpu_custom_call.1} parent=5 // pred_check
        %p1085 = pneg %p1084
      $region54: #{tpu_custom_call.1} parent=5 // pred_check_branch
        %1087 = sbr.rel (%p1085) target = $region56
      $region55: #{tpu_custom_call.1} parent=5 // pred_region
        %s1088 = ssub.s32 %s18, 2
        // Predicated region
        $region57: #{tpu_custom_call.1} parent=55 // pred_check
          %p1089 = pneg %p199
        $region58: #{tpu_custom_call.1} parent=55 // pred_check_branch
          %1091 = sbr.rel (%p1089) target = $region60
        $region59: #{tpu_custom_call.1} parent=55 // pred_region
          %s1092 = sand.u32 %s184, 1
          %s1093 = scalar_lea.sflag [#allocation4], %s1092
          %s1094 = sand.u32 %s184, 1
          %s1095 = smul.addr %s1094, 2
          %s1096 = scalar_lea.vmem [#allocation3], %s1095
          %1097 = dma.done %s1093, 32
        $region60: #{tpu_custom_call.1} parent=55 // pred_fallthru
          _
      $region56: #{tpu_custom_call.1} parent=5 // pred_fallthru
        _
    $region6: #{tpu_custom_call.1} parent=1 // loop_footer
      %s22 = sadd.s32 1, %s18
    $region7: #{tpu_custom_call.1} parent=1 // loop_footer_branch
      %17 = sbr.rel target = $region3
    $region8: #{tpu_custom_call.1} parent=1 // loop_exit
      _
    %1098 = vsyncpa [#allocation4], 1
    %s1099 = scalar_lea.sflag [#allocation4], 1
    %1100 = vsyncpa %s1099, 1

</llo_original>
